<compile_context>
chip_gen: v7x
topology: tpu7x:2x2x1
jax: 0.10.0
libtpu: 0.0.40
codegen_flags: <defaults>
</compile_context>

<pallas_src>
import functools

import jax
import jax.numpy as jnp
import numpy as np
from jax import lax
from jax.experimental import pallas as pl
from jax.experimental.pallas import tpu as pltpu


def _round_up(x, m):
    return (x + m - 1) // m * m


def re2_encoder_kernel(x_ref, m_ref, w1_ref, b1_ref, w2_ref, b2_ref,
                       o_ref, xpad_ref, hpad_ref, *, ksize):
    # x_ref   : (L, E)         f32   raw input block (one batch element)
    # m_ref   : (L, 1)         f32   mask
    # w1_ref  : (K * Ep, Fp)   bf16  conv1 im2col weight slab (taps stacked on rows)
    # w2_ref  : (K * Fp, Fp)   bf16  conv2 im2col weight slab
    # b1_ref/b2_ref : (1, Fp)  f32
    # o_ref   : (L, Fp)        f32   lane-dense output block (Fp % 128 == 0)
    # xpad_ref: (L+K-1, Ep)    f32   scratch: channel- and 'same'-padded input
    # hpad_ref: (L+K-1, Fp)    bf16  scratch: 'same'-padded hidden activations
    L, E = x_ref.shape
    Fp = o_ref.shape[1]
    Lp, Ep = xpad_ref.shape
    K = ksize
    pad_lo = (K - 1) // 2
    pad_hi = K - 1 - pad_lo

    # ---- layer 0: mask * x -> conv1 ('same') -> +b -> relu -----------------
    # Channel padding (E -> Ep) and sequence padding (L -> L+K-1) are done in
    # VMEM scratch (zero whole buffer + interior store); zeroing every grid
    # iteration keeps this correct if the batch axis is split across cores.
    xpad_ref[...] = jnp.zeros((Lp, Ep), xpad_ref.dtype)
    xpad_ref[pad_lo:pad_lo + L, :E] = x_ref[...] * m_ref[...]

    # K taps fused into a single MXU matmul via in-kernel im2col.
    x_col = jnp.concatenate([xpad_ref[k:k + L, :] for k in range(K)],
                            axis=1).astype(jnp.bfloat16)            # (L, K*Ep)
    h = jnp.dot(x_col, w1_ref[...], preferred_element_type=jnp.float32)
    h = jnp.maximum(h + b1_ref[...], 0.0)                           # (L, Fp) f32

    # ---- layer 1: mask * h -> dropout(eval)=id -> conv2 -> +b -> relu ------
    hm = (h * m_ref[...]).astype(jnp.bfloat16)                      # (L, Fp)
    if pad_lo > 0:
        hpad_ref[0:pad_lo, :] = jnp.zeros((pad_lo, Fp), jnp.bfloat16)
    if pad_hi > 0:
        hpad_ref[pad_lo + L:Lp, :] = jnp.zeros((pad_hi, Fp), jnp.bfloat16)
    hpad_ref[pad_lo:pad_lo + L, :] = hm

    h_col = jnp.concatenate([hpad_ref[k:k + L, :] for k in range(K)],
                            axis=1)                                  # (L, K*Fp) bf16
    y = jnp.dot(h_col, w2_ref[...], preferred_element_type=jnp.float32)
    o_ref[...] = jnp.maximum(y + b2_ref[...], 0.0)   # final dropout: identity (eval)


@functools.partial(jax.jit, static_argnames=("kernel_size",))
def re2_encoder(x, mask, w1, b1, w2, b2, *, kernel_size=3):
    """x: (N, L, E), mask: (N, L, 1). Weights in PyTorch Conv1d layout:
       w1: (F, E, K), w2: (F, F, K), b1/b2: (F,). Returns (N, L, F)."""
    N, L, E = x.shape
    F = w1.shape[0]
    K = kernel_size
    Ep = _round_up(E, 128)     # lane-dense input channels (in VMEM only)
    Fp = _round_up(F, 128)     # lane-dense output channels
    Lp = L + K - 1

    def pack_w(w, cin, cin_p):
        # PyTorch (F, cin, K) -> im2col slab (K * cin_p, Fp), bf16 for the MXU.
        wk = jnp.transpose(w.astype(jnp.float32), (2, 1, 0))        # (K, cin, F)
        wk = jnp.pad(wk, ((0, 0), (0, cin_p - cin), (0, Fp - F)))
        return wk.reshape(K * cin_p, Fp).astype(jnp.bfloat16)

    w1p = pack_w(w1, E, Ep)
    w2p = pack_w(w2, F, Fp)
    b1p = jnp.pad(b1.astype(jnp.float32), (0, Fp - F)).reshape(1, Fp)
    b2p = jnp.pad(b2.astype(jnp.float32), (0, Fp - F)).reshape(1, Fp)

    kernel = functools.partial(re2_encoder_kernel, ksize=K)

    out = pl.pallas_call(
        kernel,
        grid=(N,),
        out_shape=jax.ShapeDtypeStruct((N, L, Fp), jnp.float32),
        in_specs=[
            pl.BlockSpec((None, L, E), lambda b: (b, 0, 0)),   # raw input (unpadded)
            pl.BlockSpec((None, L, 1), lambda b: (b, 0, 0)),   # mask
            pl.BlockSpec((K * Ep, Fp), lambda b: (0, 0)),      # conv1 weights (resident)
            pl.BlockSpec((1, Fp), lambda b: (0, 0)),           # conv1 bias
            pl.BlockSpec((K * Fp, Fp), lambda b: (0, 0)),      # conv2 weights (resident)
            pl.BlockSpec((1, Fp), lambda b: (0, 0)),           # conv2 bias
        ],
        out_specs=pl.BlockSpec((None, L, Fp), lambda b: (b, 0, 0)),
        scratch_shapes=[
            pltpu.VMEM((Lp, Ep), jnp.float32),     # conv1 padded-input buffer
            pltpu.VMEM((Lp, Fp), jnp.bfloat16),    # conv2 'same' pad buffer
        ],
        compiler_params=pltpu.CompilerParams(
            dimension_semantics=("parallel",),                 # megacore on v7x
            vmem_limit_bytes=32 * 1024 * 1024,                 # safe on v5e/v6e/v7x
        ),
    )(x.astype(jnp.float32), mask.astype(jnp.float32), w1p, b1p, w2p, b2p)

    return out[:, :, :F]   # drop lane padding


def _reference(x, mask, w1, b1, w2, b2):
    """Pure-JAX f32 reference mirroring Re2Encoder.forward (eval-mode dropout)."""
    def conv1d_same(x_ncl, w, b):
        y = lax.conv_general_dilated(
            x_ncl, w, window_strides=(1,), padding="SAME",
            dimension_numbers=("NCH", "OIH", "NCH"))
        return y + b.reshape(1, -1, 1)

    h = mask * x                                          # (N, L, E)
    h = conv1d_same(jnp.transpose(h, (0, 2, 1)), w1, b1)  # (N, F, L)
    h = jnp.maximum(jnp.transpose(h, (0, 2, 1)), 0.0)     # (N, L, F)
    h = mask * h                                          # (dropout_1: identity in eval)
    h = conv1d_same(jnp.transpose(h, (0, 2, 1)), w2, b2)
    return jnp.maximum(jnp.transpose(h, (0, 2, 1)), 0.0)  # (final dropout: identity)


if __name__ == "__main__":
    N, L, E = 2, 16, 4      # batch, seq_len, embedding_size
    F, K = 32, 3            # filters_num, kernel_size

    key = jax.random.PRNGKey(0)
    kx, km, kw1, kb1, kw2, kb2 = jax.random.split(key, 6)

    x = jax.random.normal(kx, (N, L, E), jnp.float32)
    mask = (jax.random.uniform(km, (N, L, 1)) > 0.2).astype(jnp.float32)

    # deterministic parameters in PyTorch Conv1d layout
    w1 = jax.random.normal(kw1, (F, E, K), jnp.float32) * 0.2   # enc_conv1d_0.weight
    b1 = jax.random.normal(kb1, (F,), jnp.float32) * 0.1        # enc_conv1d_0.bias
    w2 = jax.random.normal(kw2, (F, F, K), jnp.float32) * 0.1   # enc_conv1d_1.weight
    b2 = jax.random.normal(kb2, (F,), jnp.float32) * 0.1        # enc_conv1d_1.bias

    out = re2_encoder(x, mask, w1, b1, w2, b2, kernel_size=K)
    out = jax.block_until_ready(out)

    ref = _reference(x, mask, w1, b1, w2, b2)
    # tolerance covers bf16 MXU-operand rounding (accumulation is f32)
    np.testing.assert_allclose(np.asarray(out), np.asarray(ref), rtol=2e-2, atol=2e-2)

    print("KERNEL_OK")
</pallas_src>

<mosaic_0001>
module attributes {stable_mosaic.version = 11 : i64} {
  func.func @re2_encoder_kernel(%arg0: i32, %arg1: memref<1x16x4xf32, #tpu.memory_space<vmem>>, %arg2: memref<1x16x1xf32, #tpu.memory_space<vmem>>, %arg3: memref<384x128xbf16, #tpu.memory_space<vmem>>, %arg4: memref<1x128xf32, #tpu.memory_space<vmem>>, %arg5: memref<384x128xbf16, #tpu.memory_space<vmem>>, %arg6: memref<1x128xf32, #tpu.memory_space<vmem>>, %arg7: memref<1x16x128xf32, #tpu.memory_space<vmem>>, %arg8: memref<18x128xf32, #tpu.memory_space<vmem>>, %arg9: memref<18x128xbf16, #tpu.memory_space<vmem>>) attributes {dimension_semantics = [#tpu.dimension_semantics<parallel>], iteration_bounds = array<i64: 2>, scalar_prefetch = 0 : i64, scratch_operands = 2 : i64, tpu.core_type = #tpu.core_type<tc>, window_params = [{transform_indices = @transform_0, window_bounds = array<i64: 1, 16, 4>}, {transform_indices = @transform_1, window_bounds = array<i64: 1, 16, 1>}, {pipeline_mode = #tpu.pipeline_mode<synchronous>, transform_indices = @transform_2, window_bounds = array<i64: 384, 128>}, {pipeline_mode = #tpu.pipeline_mode<synchronous>, transform_indices = @transform_3, window_bounds = array<i64: 1, 128>}, {pipeline_mode = #tpu.pipeline_mode<synchronous>, transform_indices = @transform_4, window_bounds = array<i64: 384, 128>}, {pipeline_mode = #tpu.pipeline_mode<synchronous>, transform_indices = @transform_5, window_bounds = array<i64: 1, 128>}, {transform_indices = @transform_6, window_bounds = array<i64: 1, 16, 128>}]} {
    %cst = arith.constant 0.000000e+00 : f32
    %0 = vector.broadcast %cst : f32 to vector<18x128xf32>
    %c0 = arith.constant 0 : index
    %c0_0 = arith.constant 0 : index
    %1 = vector.load %arg8[%c0, %c0_0] : memref<18x128xf32, #tpu.memory_space<vmem>>, vector<18x128xf32>
    tpu.vector_store %arg8[%c0, %c0_0], %0 {strides = array<i32>} : memref<18x128xf32, #tpu.memory_space<vmem>>, vector<18x128xf32>,
    %c0_1 = arith.constant 0 : index
    %c0_2 = arith.constant 0 : index
    %c0_3 = arith.constant 0 : index
    %2 = vector.load %arg1[%c0_1, %c0_2, %c0_3] : memref<1x16x4xf32, #tpu.memory_space<vmem>>, vector<1x16x4xf32>
    %3 = vector.shape_cast %2 : vector<1x16x4xf32> to vector<16x4xf32>
    %c0_4 = arith.constant 0 : index
    %c0_5 = arith.constant 0 : index
    %c0_6 = arith.constant 0 : index
    %4 = vector.load %arg2[%c0_4, %c0_5, %c0_6] : memref<1x16x1xf32, #tpu.memory_space<vmem>>, vector<1x16x1xf32>
    %5 = vector.shape_cast %4 : vector<1x16x1xf32> to vector<16x1xf32>
    %6 = vector.broadcast %5 : vector<16x1xf32> to vector<16x4xf32>
    %7 = arith.mulf %3, %6 : vector<16x4xf32>
    %c1 = arith.constant 1 : index
    %c0_7 = arith.constant 0 : index
    %8 = vector.load %arg8[%c1, %c0_7] : memref<18x128xf32, #tpu.memory_space<vmem>>, vector<16x4xf32>
    tpu.vector_store %arg8[%c1, %c0_7], %7 {strides = array<i32>} : memref<18x128xf32, #tpu.memory_space<vmem>>, vector<16x4xf32>,
    %c0_8 = arith.constant 0 : index
    %c0_9 = arith.constant 0 : index
    %9 = vector.load %arg8[%c0_8, %c0_9] : memref<18x128xf32, #tpu.memory_space<vmem>>, vector<16x128xf32>
    %c1_10 = arith.constant 1 : index
    %c0_11 = arith.constant 0 : index
    %10 = vector.load %arg8[%c1_10, %c0_11] : memref<18x128xf32, #tpu.memory_space<vmem>>, vector<16x128xf32>
    %c2 = arith.constant 2 : index
    %c0_12 = arith.constant 0 : index
    %11 = vector.load %arg8[%c2, %c0_12] : memref<18x128xf32, #tpu.memory_space<vmem>>, vector<16x128xf32>
    %12 = tpu.concatenate %9, %10, %11 in 1 : vector<16x128xf32>, vector<16x128xf32>, vector<16x128xf32> -> vector<16x384xf32>
    %13 = arith.truncf %12 : vector<16x384xf32> to vector<16x384xbf16>
    %c0_13 = arith.constant 0 : index
    %c0_14 = arith.constant 0 : index
    %14 = vector.load %arg3[%c0_13, %c0_14] : memref<384x128xbf16, #tpu.memory_space<vmem>>, vector<384x128xbf16>
    %cst_15 = arith.constant dense<0.000000e+00> : vector<16x128xf32>
    %15 = tpu.matmul %13, %14, %cst_15 {dimension_numbers = #tpu.dot_dimension_numbers<[1], [0], [0], [1], [0, 0, 1, 1], [], []>} : vector<16x384xbf16>, vector<384x128xbf16>, vector<16x128xf32> -> vector<16x128xf32>
    %c0_16 = arith.constant 0 : index
    %c0_17 = arith.constant 0 : index
    %16 = vector.load %arg4[%c0_16, %c0_17] : memref<1x128xf32, #tpu.memory_space<vmem>>, vector<1x128xf32>
    %17 = vector.broadcast %16 : vector<1x128xf32> to vector<16x128xf32>
    %18 = arith.addf %15, %17 : vector<16x128xf32>
    %cst_18 = arith.constant 0.000000e+00 : f32
    %19 = vector.broadcast %cst_18 : f32 to vector<16x128xf32>
    %20 = arith.maximumf %18, %19 : vector<16x128xf32>
    %c0_19 = arith.constant 0 : index
    %c0_20 = arith.constant 0 : index
    %c0_21 = arith.constant 0 : index
    %21 = vector.load %arg2[%c0_19, %c0_20, %c0_21] : memref<1x16x1xf32, #tpu.memory_space<vmem>>, vector<1x16x1xf32>
    %22 = vector.shape_cast %21 : vector<1x16x1xf32> to vector<16x1xf32>
    %23 = vector.broadcast %22 : vector<16x1xf32> to vector<16x128xf32>
    %24 = arith.mulf %20, %23 : vector<16x128xf32>
    %25 = arith.truncf %24 : vector<16x128xf32> to vector<16x128xbf16>
    %cst_22 = arith.constant 0.000000e+00 : bf16
    %26 = vector.broadcast %cst_22 : bf16 to vector<1x128xbf16>
    %c0_23 = arith.constant 0 : index
    %c0_24 = arith.constant 0 : index
    %27 = vector.load %arg9[%c0_23, %c0_24] : memref<18x128xbf16, #tpu.memory_space<vmem>>, vector<1x128xbf16>
    tpu.vector_store %arg9[%c0_23, %c0_24], %26 {strides = array<i32>} : memref<18x128xbf16, #tpu.memory_space<vmem>>, vector<1x128xbf16>,
    %cst_25 = arith.constant 0.000000e+00 : bf16
    %28 = vector.broadcast %cst_25 : bf16 to vector<1x128xbf16>
    %c17 = arith.constant 17 : index
    %c0_26 = arith.constant 0 : index
    %29 = vector.load %arg9[%c17, %c0_26] : memref<18x128xbf16, #tpu.memory_space<vmem>>, vector<1x128xbf16>
    tpu.vector_store %arg9[%c17, %c0_26], %28 {strides = array<i32>} : memref<18x128xbf16, #tpu.memory_space<vmem>>, vector<1x128xbf16>,
    %c1_27 = arith.constant 1 : index
    %c0_28 = arith.constant 0 : index
    %30 = vector.load %arg9[%c1_27, %c0_28] : memref<18x128xbf16, #tpu.memory_space<vmem>>, vector<16x128xbf16>
    tpu.vector_store %arg9[%c1_27, %c0_28], %25 {strides = array<i32>} : memref<18x128xbf16, #tpu.memory_space<vmem>>, vector<16x128xbf16>,
    %c0_29 = arith.constant 0 : index
    %c0_30 = arith.constant 0 : index
    %31 = vector.load %arg9[%c0_29, %c0_30] : memref<18x128xbf16, #tpu.memory_space<vmem>>, vector<16x128xbf16>
    %c1_31 = arith.constant 1 : index
    %c0_32 = arith.constant 0 : index
    %32 = vector.load %arg9[%c1_31, %c0_32] : memref<18x128xbf16, #tpu.memory_space<vmem>>, vector<16x128xbf16>
    %c2_33 = arith.constant 2 : index
    %c0_34 = arith.constant 0 : index
    %33 = vector.load %arg9[%c2_33, %c0_34] : memref<18x128xbf16, #tpu.memory_space<vmem>>, vector<16x128xbf16>
    %34 = tpu.concatenate %31, %32, %33 in 1 : vector<16x128xbf16>, vector<16x128xbf16>, vector<16x128xbf16> -> vector<16x384xbf16>
    %c0_35 = arith.constant 0 : index
    %c0_36 = arith.constant 0 : index
    %35 = vector.load %arg5[%c0_35, %c0_36] : memref<384x128xbf16, #tpu.memory_space<vmem>>, vector<384x128xbf16>
    %cst_37 = arith.constant dense<0.000000e+00> : vector<16x128xf32>
    %36 = tpu.matmul %34, %35, %cst_37 {dimension_numbers = #tpu.dot_dimension_numbers<[1], [0], [0], [1], [0, 0, 1, 1], [], []>} : vector<16x384xbf16>, vector<384x128xbf16>, vector<16x128xf32> -> vector<16x128xf32>
    %c0_38 = arith.constant 0 : index
    %c0_39 = arith.constant 0 : index
    %37 = vector.load %arg6[%c0_38, %c0_39] : memref<1x128xf32, #tpu.memory_space<vmem>>, vector<1x128xf32>
    %38 = vector.broadcast %37 : vector<1x128xf32> to vector<16x128xf32>
    %39 = arith.addf %36, %38 : vector<16x128xf32>
    %cst_40 = arith.constant 0.000000e+00 : f32
    %40 = vector.broadcast %cst_40 : f32 to vector<16x128xf32>
    %41 = arith.maximumf %39, %40 : vector<16x128xf32>
    %c0_41 = arith.constant 0 : index
    %c0_42 = arith.constant 0 : index
    %c0_43 = arith.constant 0 : index
    %42 = vector.load %arg7[%c0_41, %c0_42, %c0_43] : memref<1x16x128xf32, #tpu.memory_space<vmem>>, vector<1x16x128xf32>
    %43 = vector.shape_cast %42 : vector<1x16x128xf32> to vector<16x128xf32>
    %44 = vector.shape_cast %41 : vector<16x128xf32> to vector<1x16x128xf32>
    tpu.vector_store %arg7[%c0_41, %c0_42, %c0_43], %44 {strides = array<i32>} : memref<1x16x128xf32, #tpu.memory_space<vmem>>, vector<1x16x128xf32>,
    return
  }
  func.func @transform_0(%arg0: i32) -> (i32, i32, i32) {
    %c0_i32 = arith.constant 0 : i32
    %c0_i32_0 = arith.constant 0 : i32
    %c0_i32_1 = arith.constant 0 : i32
    return %arg0, %c0_i32, %c0_i32_0 : i32, i32, i32
  }
  func.func @transform_1(%arg0: i32) -> (i32, i32, i32) {
    %c0_i32 = arith.constant 0 : i32
    %c0_i32_0 = arith.constant 0 : i32
    %c0_i32_1 = arith.constant 0 : i32
    return %arg0, %c0_i32, %c0_i32_0 : i32, i32, i32
  }
  func.func @transform_2(%arg0: i32) -> (i32, i32) {
    %c0_i32 = arith.constant 0 : i32
    %c0_i32_0 = arith.constant 0 : i32
    %c0_i32_1 = arith.constant 0 : i32
    return %c0_i32, %c0_i32_0 : i32, i32
  }
  func.func @transform_3(%arg0: i32) -> (i32, i32) {
    %c0_i32 = arith.constant 0 : i32
    %c0_i32_0 = arith.constant 0 : i32
    %c0_i32_1 = arith.constant 0 : i32
    return %c0_i32, %c0_i32_0 : i32, i32
  }
  func.func @transform_4(%arg0: i32) -> (i32, i32) {
    %c0_i32 = arith.constant 0 : i32
    %c0_i32_0 = arith.constant 0 : i32
    %c0_i32_1 = arith.constant 0 : i32
    return %c0_i32, %c0_i32_0 : i32, i32
  }
  func.func @transform_5(%arg0: i32) -> (i32, i32) {
    %c0_i32 = arith.constant 0 : i32
    %c0_i32_0 = arith.constant 0 : i32
    %c0_i32_1 = arith.constant 0 : i32
    return %c0_i32, %c0_i32_0 : i32, i32
  }
  func.func @transform_6(%arg0: i32) -> (i32, i32, i32) {
    %c0_i32 = arith.constant 0 : i32
    %c0_i32_0 = arith.constant 0 : i32
    %c0_i32_1 = arith.constant 0 : i32
    return %arg0, %c0_i32, %c0_i32_0 : i32, i32, i32
  }
}

</mosaic_0001>

<llo_original>
// kernel: re2_encoder.1
$region0: #{re2_encoder.1}
  #allocation0 [shape = 'u32[]', space=smem, size = 0x4, offset = 0x4, fixed_abs, tag = 'smem constant byte address 0x4 - core index']
  #allocation1 [shape = 'u32[144,128]{1,0:T(1,128)}', space=vmem, size = 0x12000, scoped, tag = 'internal scratch']
  #allocation2 [shape = 'f32[18,128]{1,0:T(8,128)}', space=vmem, size = 0x3000, scoped, tag = 'scratch operand']
  #allocation3 [shape = 'bf16[18,128]{1,0:T(8,128)(2,1)}', space=vmem, size = 0x1800, scoped, tag = 'scratch operand']
  %s0 = inlined_call_operand.vmem [shape: f32[2,16,4], index: 0, kind: input, shape index: {}]
  %s1 = inlined_call_operand.vmem [shape: f32[2,16,1], index: 1, kind: input, shape index: {}]
  %s2 = inlined_call_operand.vmem [shape: bf16[384,128], index: 2, kind: input, shape index: {}]
  %s3 = inlined_call_operand.vmem [shape: f32[1,128], index: 3, kind: input, shape index: {}]
  %s4 = inlined_call_operand.vmem [shape: bf16[384,128], index: 4, kind: input, shape index: {}]
  %s5 = inlined_call_operand.vmem [shape: f32[1,128], index: 5, kind: input, shape index: {}]
  %s6 = inlined_call_operand.hbm [shape: f32[2,16,128], index: 6, kind: output, shape index: {}]
  %s7 = sld [smem:[#allocation0]]
  $region57: #{re2_encoder.1} parent=0
    _
  %s9 = ssub.s32 1, %s7
  %s10 = scalar_select 0, %s9, %s7
  $region1: #{re2_encoder.1} parent=0
    #allocation4 [shape = 'u8[16384]{0}', space=vmem, size = 0x4000, scoped, tag = 'output window, operand 0']
    #allocation5 [shape = 's32[2]{0}', space=sflag, size = 0x8, scoped, tag = 'scoped memory for re2_encoder.1']
    %11 = vsyncpa [#allocation5], 0
    %s12 = scalar_lea.sflag [#allocation5], 1
    %13 = vsyncpa %s12, 0
    loop: start=0, step=1, limit=4
    $region2: #{re2_encoder.1} parent=1 // loop_pre_header
      _
    $region3: #{re2_encoder.1} parent=1 // loop_header
      %s15 = sphi 0, %s19
      %p16 = scmp.ge.s32.totalorder %s15, 4
      %s25 = sphi 0, %s27
      %s28 = sphi 0, %s25
      %s29 = sphi 0, %s28
      %s45 = sphi 0, %s29
      %s51 = sphi 0, %s53
      %s54 = sphi 0, %s51
      %s55 = sphi 0, %s54
      %s71 = sphi 0, %s55
      %s75 = sphi 0, %s75
      %s77 = sphi 0, %s75
      %s78 = sphi 0, %s77
      %s92 = sphi 0, %s78
      %s96 = sphi 0, %s96
      %s98 = sphi 0, %s96
      %s99 = sphi 0, %s98
      %s113 = sphi 0, %s99
      %s117 = sphi 0, %s117
      %s119 = sphi 0, %s117
      %s120 = sphi 0, %s119
      %s134 = sphi 0, %s120
      %s138 = sphi 0, %s138
      %s140 = sphi 0, %s138
      %s141 = sphi 0, %s140
      %s155 = sphi 0, %s141
      %s161 = sphi 0, %s163
      %s164 = sphi 0, %s161
      %s165 = sphi 0, %s164
      %s181 = sphi 0, %s165
    $region4: #{re2_encoder.1} parent=1 // loop_header_branch
      %18 = sbr.rel (%p16) target = $region8
    $region5: #{re2_encoder.1} parent=1 // loop_body
      %s20 = ssub.s32 %s15, 1
      %s21 = ssub.s32 %s15, 2
      %s22 = sadd.s32 %s15, 1
      %s23 = ssub.s32 %s15, %s22
      %p24 = scmp.eq.s32.totalorder %s23, 0
      %s26 = sadd.s32 %s25, 1
      %s27 = scalar_select %p24, %s25, %s26
      %p30 = pneg %p24
      %p31 = scmp.eq.s32.totalorder %s15, 1
      %p32 = por %p30, %p31
      %p33 = scmp.ne.s32.totalorder %s25, %s28
      %p34 = scmp.eq.s32.totalorder %s15, 0
      %p35 = por %p33, %p34
      %p36 = scmp.ne.s32.totalorder %s25, %s28
      %p37 = scmp.eq.s32.totalorder %s20, 1
      %p38 = por %p36, %p37
      %p39 = scmp.ne.s32.totalorder %s28, %s29
      %p40 = scmp.eq.s32.totalorder %s20, 0
      %p41 = por %p39, %p40
      %p42 = scmp.ne.s32.totalorder %s28, %s29
      %p43 = scmp.eq.s32.totalorder %s21, 1
      %p44 = por %p42, %p43
      %p46 = scmp.ne.s32.totalorder %s29, %s45
      %p47 = scmp.eq.s32.totalorder %s21, 0
      %p48 = por %p46, %p47
      %s49 = ssub.s32 %s15, %s22
      %p50 = scmp.eq.s32.totalorder %s49, 0
      %s52 = sadd.s32 %s51, 1
      %s53 = scalar_select %p50, %s51, %s52
      %p56 = pneg %p50
      %p57 = scmp.eq.s32.totalorder %s15, 1
      %p58 = por %p56, %p57
      %p59 = scmp.ne.s32.totalorder %s51, %s54
      %p60 = scmp.eq.s32.totalorder %s15, 0
      %p61 = por %p59, %p60
      %p62 = scmp.ne.s32.totalorder %s51, %s54
      %p63 = scmp.eq.s32.totalorder %s20, 1
      %p64 = por %p62, %p63
      %p65 = scmp.ne.s32.totalorder %s54, %s55
      %p66 = scmp.eq.s32.totalorder %s20, 0
      %p67 = por %p65, %p66
      %p68 = scmp.ne.s32.totalorder %s54, %s55
      %p69 = scmp.eq.s32.totalorder %s21, 1
      %p70 = por %p68, %p69
      %p72 = scmp.ne.s32.totalorder %s55, %s71
      %p73 = scmp.eq.s32.totalorder %s21, 0
      %p74 = por %p72, %p73
      %s76 = sadd.s32 %s75, 1
      %p79 = scmp.eq.s32.totalorder %s15, 1
      %p80 = scmp.ne.s32.totalorder %s75, %s77
      %p81 = scmp.eq.s32.totalorder %s15, 0
      %p82 = por %p80, %p81
      %p83 = scmp.ne.s32.totalorder %s75, %s77
      %p84 = scmp.eq.s32.totalorder %s20, 1
      %p85 = por %p83, %p84
      %p86 = scmp.ne.s32.totalorder %s77, %s78
      %p87 = scmp.eq.s32.totalorder %s20, 0
      %p88 = por %p86, %p87
      %p89 = scmp.ne.s32.totalorder %s77, %s78
      %p90 = scmp.eq.s32.totalorder %s21, 1
      %p91 = por %p89, %p90
      %p93 = scmp.ne.s32.totalorder %s78, %s92
      %p94 = scmp.eq.s32.totalorder %s21, 0
      %p95 = por %p93, %p94
      %s97 = sadd.s32 %s96, 1
      %p100 = scmp.eq.s32.totalorder %s15, 1
      %p101 = scmp.ne.s32.totalorder %s96, %s98
      %p102 = scmp.eq.s32.totalorder %s15, 0
      %p103 = por %p101, %p102
      %p104 = scmp.ne.s32.totalorder %s96, %s98
      %p105 = scmp.eq.s32.totalorder %s20, 1
      %p106 = por %p104, %p105
      %p107 = scmp.ne.s32.totalorder %s98, %s99
      %p108 = scmp.eq.s32.totalorder %s20, 0
      %p109 = por %p107, %p108
      %p110 = scmp.ne.s32.totalorder %s98, %s99
      %p111 = scmp.eq.s32.totalorder %s21, 1
      %p112 = por %p110, %p111
      %p114 = scmp.ne.s32.totalorder %s99, %s113
      %p115 = scmp.eq.s32.totalorder %s21, 0
      %p116 = por %p114, %p115
      %s118 = sadd.s32 %s117, 1
      %p121 = scmp.eq.s32.totalorder %s15, 1
      %p122 = scmp.ne.s32.totalorder %s117, %s119
      %p123 = scmp.eq.s32.totalorder %s15, 0
      %p124 = por %p122, %p123
      %p125 = scmp.ne.s32.totalorder %s117, %s119
      %p126 = scmp.eq.s32.totalorder %s20, 1
      %p127 = por %p125, %p126
      %p128 = scmp.ne.s32.totalorder %s119, %s120
      %p129 = scmp.eq.s32.totalorder %s20, 0
      %p130 = por %p128, %p129
      %p131 = scmp.ne.s32.totalorder %s119, %s120
      %p132 = scmp.eq.s32.totalorder %s21, 1
      %p133 = por %p131, %p132
      %p135 = scmp.ne.s32.totalorder %s120, %s134
      %p136 = scmp.eq.s32.totalorder %s21, 0
      %p137 = por %p135, %p136
      %s139 = sadd.s32 %s138, 1
      %p142 = scmp.eq.s32.totalorder %s15, 1
      %p143 = scmp.ne.s32.totalorder %s138, %s140
      %p144 = scmp.eq.s32.totalorder %s15, 0
      %p145 = por %p143, %p144
      %p146 = scmp.ne.s32.totalorder %s138, %s140
      %p147 = scmp.eq.s32.totalorder %s20, 1
      %p148 = por %p146, %p147
      %p149 = scmp.ne.s32.totalorder %s140, %s141
      %p150 = scmp.eq.s32.totalorder %s20, 0
      %p151 = por %p149, %p150
      %p152 = scmp.ne.s32.totalorder %s140, %s141
      %p153 = scmp.eq.s32.totalorder %s21, 1
      %p154 = por %p152, %p153
      %p156 = scmp.ne.s32.totalorder %s141, %s155
      %p157 = scmp.eq.s32.totalorder %s21, 0
      %p158 = por %p156, %p157
      %s159 = ssub.s32 %s15, %s22
      %p160 = scmp.eq.s32.totalorder %s159, 0
      %s162 = sadd.s32 %s161, 1
      %s163 = scalar_select %p160, %s161, %s162
      %p166 = pneg %p160
      %p167 = scmp.eq.s32.totalorder %s15, 1
      %p168 = por %p166, %p167
      %p169 = scmp.ne.s32.totalorder %s161, %s164
      %p170 = scmp.eq.s32.totalorder %s15, 0
      %p171 = por %p169, %p170
      %p172 = scmp.ne.s32.totalorder %s161, %s164
      %p173 = scmp.eq.s32.totalorder %s20, 1
      %p174 = por %p172, %p173
      %p175 = scmp.ne.s32.totalorder %s164, %s165
      %p176 = scmp.eq.s32.totalorder %s20, 0
      %p177 = por %p175, %p176
      %p178 = scmp.ne.s32.totalorder %s164, %s165
      %p179 = scmp.eq.s32.totalorder %s21, 1
      %p180 = por %p178, %p179
      %p182 = scmp.ne.s32.totalorder %s165, %s181
      %p183 = scmp.eq.s32.totalorder %s21, 0
      %p184 = por %p182, %p183
      %p185 = scmp.le.s32.totalorder 1, %s15
      %p186 = scmp.lt.s32.totalorder %s15, 3
      %p187 = pnand %p185, %p186
      %p188 = pneg %p187
      // Predicated region
      $region9: #{re2_encoder.1} parent=5 // pred_check
        _
      $region10: #{re2_encoder.1} parent=5 // pred_check_branch
        %190 = sbr.rel (%p187) target = $region12
      $region11: #{re2_encoder.1} parent=5 // pred_region
        %s191 = ssub.s32 %s15, 1
        // Predicated region
        $region13: #{re2_encoder.1} parent=11 // pred_check
          %p192 = pneg %p88
        $region14: #{re2_encoder.1} parent=11 // pred_check_branch
          %194 = sbr.rel (%p192) target = $region16
        $region15: #{re2_encoder.1} parent=11 // pred_region
          _
        $region16: #{re2_encoder.1} parent=11 // pred_fallthru
          _
        // Predicated region
        $region17: #{re2_encoder.1} parent=11 // pred_check
          %p195 = pneg %p109
        $region18: #{re2_encoder.1} parent=11 // pred_check_branch
          %197 = sbr.rel (%p195) target = $region20
        $region19: #{re2_encoder.1} parent=11 // pred_region
          _
        $region20: #{re2_encoder.1} parent=11 // pred_fallthru
          _
        // Predicated region
        $region21: #{re2_encoder.1} parent=11 // pred_check
          %p198 = pneg %p130
        $region22: #{re2_encoder.1} parent=11 // pred_check_branch
          %200 = sbr.rel (%p198) target = $region24
        $region23: #{re2_encoder.1} parent=11 // pred_region
          _
        $region24: #{re2_encoder.1} parent=11 // pred_fallthru
          _
        // Predicated region
        $region25: #{re2_encoder.1} parent=11 // pred_check
          %p201 = pneg %p151
        $region26: #{re2_encoder.1} parent=11 // pred_check_branch
          %203 = sbr.rel (%p201) target = $region28
        $region27: #{re2_encoder.1} parent=11 // pred_region
          _
        $region28: #{re2_encoder.1} parent=11 // pred_fallthru
          _
      $region12: #{re2_encoder.1} parent=5 // pred_fallthru
        _
      %p204 = scmp.lt.s32.totalorder %s15, 2
      // Predicated region
      $region29: #{re2_encoder.1} parent=5 // pred_check
        %p205 = pneg %p204
      $region30: #{re2_encoder.1} parent=5 // pred_check_branch
        %207 = sbr.rel (%p205) target = $region32
      $region31: #{re2_encoder.1} parent=5 // pred_region
        // Predicated region
        $region33: #{re2_encoder.1} parent=31 // pred_check
          %p208 = pneg %p35
        $region34: #{re2_encoder.1} parent=31 // pred_check_branch
          %210 = sbr.rel (%p208) target = $region36
        $region35: #{re2_encoder.1} parent=31 // pred_region
          %p211 = scmp.lt.s32.totalorder %s15, 1
          %s212 = scalar_select %p211, %s15, 1
          %s213 = smul.addr %s212, 2
          %s214 = smul.addr %s213, 8
          %s215 = scalar_lea.vmem %s0, %s214
        $region36: #{re2_encoder.1} parent=31 // pred_fallthru
          _
        // Predicated region
        $region37: #{re2_encoder.1} parent=31 // pred_check
          %p216 = pneg %p61
        $region38: #{re2_encoder.1} parent=31 // pred_check_branch
          %218 = sbr.rel (%p216) target = $region40
        $region39: #{re2_encoder.1} parent=31 // pred_region
          %p219 = scmp.lt.s32.totalorder %s15, 1
          %s220 = scalar_select %p219, %s15, 1
          %s221 = smul.addr %s220, 2
          %s222 = smul.addr %s221, 8
          %s223 = scalar_lea.vmem %s1, %s222
        $region40: #{re2_encoder.1} parent=31 // pred_fallthru
          _
      $region32: #{re2_encoder.1} parent=5 // pred_fallthru
        _
      %p224 = scmp.le.s32.totalorder 1, %s15
      %p225 = scmp.lt.s32.totalorder %s15, 3
      %p226 = pnand %p224, %p225
      %p227 = pneg %p226
      // Predicated region
      $region41: #{re2_encoder.1} parent=5 // pred_check
        _
      $region42: #{re2_encoder.1} parent=5 // pred_check_branch
        %229 = sbr.rel (%p226) target = $region44
      $region43: #{re2_encoder.1} parent=5 // pred_region
        %s230 = ssub.s32 %s15, 1
        %p231 = scmp.lt.s32.totalorder %s20, 1
        %s232 = scalar_select %p231, %s20, 1
        %s233 = smul.addr %s232, 2
        %s234 = smul.addr %s233, 8
        %s235 = scalar_lea.vmem %s0, %s234
        %p236 = pneg %p41
        %p237 = pneg %p38
        %p238 = scmp.lt.s32.totalorder %s20, 1
        %s239 = scalar_select %p238, %s20, 1
        %s240 = smul.addr %s239, 2
        %s241 = smul.addr %s240, 8
        %s242 = scalar_lea.vmem %s1, %s241
        %p243 = pneg %p67
        %p244 = pneg %p64
        %p245 = pneg %p88
        %p246 = pneg %p85
        %p247 = pneg %p109
        %p248 = pneg %p106
        %p249 = pneg %p130
        %p250 = pneg %p127
        %p251 = pneg %p151
        %p252 = pneg %p148
        %p253 = pneg %p177
        %p254 = pneg %p174
        %s255 = sand.u32 %s164, 1
        %s256 = scalar_lea.sflag [#allocation5], %s255
        %s257 = sand.u32 %s164, 1
        %s258 = smul.addr %s257, 16
        %s259 = scalar_lea.vmem [#allocation4], %s258
        %p260 = scmp.lt.s32.totalorder %s20, 1
        %s261 = scalar_select %p260, %s20, 1
        %s262 = smul.addr %s261, 2
        %s263 = smul.addr %s262, 8
        %s264 = scalar_lea.vmem %s0, %s263
        %p265 = scmp.lt.s32.totalorder %s20, 1
        %s266 = scalar_select %p265, %s20, 1
        %s267 = smul.addr %s266, 2
        %s268 = smul.addr %s267, 8
        %s269 = scalar_lea.vmem %s1, %s268
        %271 = vst [vmem:[#allocation2] sm:$0xff] 0.0
        %272 = vst [vmem:[#allocation2 + $0x8] sm:$0xff] 0.0
        %273 = vst [vmem:[#allocation2 + $0x10] sm:$0x3] 0.0
        %v274 = vld [vmem:[%s264] sm:$0xff]
        %v275 = vld [vmem:[%s264 + $0x8] sm:$0xff]
        %v276 = vld [vmem:[%s269] sm:$0xff]
        %v277 = vld [vmem:[%s269 + $0x8] sm:$0xff]
        %279 = vset.pattern.permute.xlu0 0
        %280 = vperm.xlu0 %279, %v276
        %v281 = vpop.permute.xlu0 %280
        %284 = vset.pattern.permute.xlu0 0
        %285 = vperm.xlu0 %284, %v277
        %v286 = vpop.permute.xlu0 %285
        %v288 = vmul.f32 %v274, %v281
        %v289 = vmul.f32 %v275, %v286
        %vm290 = vcmask 31744
        %291 = vst.msk [vmem:[#allocation2 + $0x1] sm:$0xff] %vm290, %v288
        %292 = vst.msk [vmem:[#allocation2 + $0x9] sm:$0xff] %vm290, %v289
        %v293 = vld [vmem:[#allocation2] sm:$0xff]
        %v294 = vld [vmem:[#allocation2 + $0x8] sm:$0xff]
        %v295 = vld [vmem:[#allocation2 + $0x1] sm:$0xff]
        %v296 = vld [vmem:[#allocation2 + $0x9] sm:$0xff]
        %v297 = vld [vmem:[#allocation2 + $0x2] sm:$0xff]
        %v298 = vld [vmem:[#allocation2 + $0xa] sm:$0xff]
        %v299 = vpack.c.bf16 %v294, %v293
        %v300 = vpack.c.bf16 %v296, %v295
        %v301 = vpack.c.bf16 %v298, %v297
        %v302 = vld [vmem:[%s2] sm:$0xf]
        %v303 = vld [vmem:[%s2 + $0x4] sm:$0xf]
        %v304 = vld [vmem:[%s2 + $0x8] sm:$0xf]
        %v305 = vld [vmem:[%s2 + $0xc] sm:$0xf]
        %v306 = vld [vmem:[%s2 + $0x10] sm:$0xf]
        %v307 = vld [vmem:[%s2 + $0x14] sm:$0xf]
        %v308 = vld [vmem:[%s2 + $0x18] sm:$0xf]
        %v309 = vld [vmem:[%s2 + $0x1c] sm:$0xf]
        %v310 = vld [vmem:[%s2 + $0x20] sm:$0xf]
        %v311 = vld [vmem:[%s2 + $0x24] sm:$0xf]
        %v312 = vld [vmem:[%s2 + $0x28] sm:$0xf]
        %v313 = vld [vmem:[%s2 + $0x2c] sm:$0xf]
        %v314 = vld [vmem:[%s2 + $0x30] sm:$0xf]
        %v315 = vld [vmem:[%s2 + $0x34] sm:$0xf]
        %v316 = vld [vmem:[%s2 + $0x38] sm:$0xf]
        %v317 = vld [vmem:[%s2 + $0x3c] sm:$0xf]
        %v318 = vld [vmem:[%s2 + $0x40] sm:$0xf]
        %v319 = vld [vmem:[%s2 + $0x44] sm:$0xf]
        %v320 = vld [vmem:[%s2 + $0x48] sm:$0xf]
        %v321 = vld [vmem:[%s2 + $0x4c] sm:$0xf]
        %v322 = vld [vmem:[%s2 + $0x50] sm:$0xf]
        %v323 = vld [vmem:[%s2 + $0x54] sm:$0xf]
        %v324 = vld [vmem:[%s2 + $0x58] sm:$0xf]
        %v325 = vld [vmem:[%s2 + $0x5c] sm:$0xf]
        %v326 = vld [vmem:[%s2 + $0x60] sm:$0xf]
        %v327 = vld [vmem:[%s2 + $0x64] sm:$0xf]
        %v328 = vld [vmem:[%s2 + $0x68] sm:$0xf]
        %v329 = vld [vmem:[%s2 + $0x6c] sm:$0xf]
        %v330 = vld [vmem:[%s2 + $0x70] sm:$0xf]
        %v331 = vld [vmem:[%s2 + $0x74] sm:$0xf]
        %v332 = vld [vmem:[%s2 + $0x78] sm:$0xf]
        %v333 = vld [vmem:[%s2 + $0x7c] sm:$0xf]
        %v334 = vld [vmem:[%s2 + $0x80] sm:$0xf]
        %v335 = vld [vmem:[%s2 + $0x84] sm:$0xf]
        %v336 = vld [vmem:[%s2 + $0x88] sm:$0xf]
        %v337 = vld [vmem:[%s2 + $0x8c] sm:$0xf]
        %v338 = vld [vmem:[%s2 + $0x90] sm:$0xf]
        %v339 = vld [vmem:[%s2 + $0x94] sm:$0xf]
        %v340 = vld [vmem:[%s2 + $0x98] sm:$0xf]
        %v341 = vld [vmem:[%s2 + $0x9c] sm:$0xf]
        %v342 = vld [vmem:[%s2 + $0xa0] sm:$0xf]
        %v343 = vld [vmem:[%s2 + $0xa4] sm:$0xf]
        %v344 = vld [vmem:[%s2 + $0xa8] sm:$0xf]
        %v345 = vld [vmem:[%s2 + $0xac] sm:$0xf]
        %v346 = vld [vmem:[%s2 + $0xb0] sm:$0xf]
        %v347 = vld [vmem:[%s2 + $0xb4] sm:$0xf]
        %v348 = vld [vmem:[%s2 + $0xb8] sm:$0xf]
        %v349 = vld [vmem:[%s2 + $0xbc] sm:$0xf]
        %v350 = vld [vmem:[%s3] sm:$0x1]
        %v352 = vlaneseq
        %v353 = vshrl.u32 %v352, 7
        %v354 = vsub.s32 0, %v353
        %v355 = vrot.slane %v350, %v354
        %v405 = vunpack.c.l.b16 %v302
        %v406 = vunpack.c.l.b16 %v303
        %v407 = vunpack.c.l.b16 %v304
        %v408 = vunpack.c.l.b16 %v305
        %v409 = vunpack.c.l.b16 %v306
        %v410 = vunpack.c.l.b16 %v307
        %v411 = vunpack.c.l.b16 %v308
        %v412 = vunpack.c.l.b16 %v309
        %v413 = vunpack.c.l.b16 %v310
        %v414 = vunpack.c.l.b16 %v311
        %v415 = vunpack.c.l.b16 %v312
        %v416 = vunpack.c.l.b16 %v313
        %v417 = vunpack.c.l.b16 %v314
        %v418 = vunpack.c.l.b16 %v315
        %v419 = vunpack.c.l.b16 %v316
        %v420 = vunpack.c.l.b16 %v317
        %v421 = vunpack.c.l.b16 %v318
        %v422 = vunpack.c.l.b16 %v319
        %v423 = vunpack.c.l.b16 %v320
        %v424 = vunpack.c.l.b16 %v321
        %v425 = vunpack.c.l.b16 %v322
        %v426 = vunpack.c.l.b16 %v323
        %v427 = vunpack.c.l.b16 %v324
        %v428 = vunpack.c.l.b16 %v325
        %v429 = vunpack.c.l.b16 %v326
        %v430 = vunpack.c.l.b16 %v327
        %v431 = vunpack.c.l.b16 %v328
        %v432 = vunpack.c.l.b16 %v329
        %v433 = vunpack.c.l.b16 %v330
        %v434 = vunpack.c.l.b16 %v331
        %v435 = vunpack.c.l.b16 %v332
        %v436 = vunpack.c.l.b16 %v333
        %v437 = vunpack.c.l.b16 %v334
        %v438 = vunpack.c.l.b16 %v335
        %v439 = vunpack.c.l.b16 %v336
        %v440 = vunpack.c.l.b16 %v337
        %v441 = vunpack.c.l.b16 %v338
        %v442 = vunpack.c.l.b16 %v339
        %v443 = vunpack.c.l.b16 %v340
        %v444 = vunpack.c.l.b16 %v341
        %v445 = vunpack.c.l.b16 %v342
        %v446 = vunpack.c.l.b16 %v343
        %v447 = vunpack.c.l.b16 %v344
        %v448 = vunpack.c.l.b16 %v345
        %v449 = vunpack.c.l.b16 %v346
        %v450 = vunpack.c.l.b16 %v347
        %v451 = vunpack.c.l.b16 %v348
        %v452 = vunpack.c.l.b16 %v349
        %v453 = vpack.c.b16 %v406, %v405
        %v454 = vpack.c.b16 %v408, %v407
        %v455 = vpack.c.b16 %v410, %v409
        %v456 = vpack.c.b16 %v412, %v411
        %v457 = vpack.c.b16 %v414, %v413
        %v458 = vpack.c.b16 %v416, %v415
        %v459 = vpack.c.b16 %v418, %v417
        %v460 = vpack.c.b16 %v420, %v419
        %v461 = vpack.c.b16 %v422, %v421
        %v462 = vpack.c.b16 %v424, %v423
        %v463 = vpack.c.b16 %v426, %v425
        %v464 = vpack.c.b16 %v428, %v427
        %v465 = vpack.c.b16 %v430, %v429
        %v466 = vpack.c.b16 %v432, %v431
        %v467 = vpack.c.b16 %v434, %v433
        %v468 = vpack.c.b16 %v436, %v435
        %v469 = vpack.c.b16 %v438, %v437
        %v470 = vpack.c.b16 %v440, %v439
        %v471 = vpack.c.b16 %v442, %v441
        %v472 = vpack.c.b16 %v444, %v443
        %v473 = vpack.c.b16 %v446, %v445
        %v474 = vpack.c.b16 %v448, %v447
        %v475 = vpack.c.b16 %v450, %v449
        %v476 = vpack.c.b16 %v452, %v451
        %501 = vmatprep.subr.bf16.mxu0 0
        %502 = vmatpush1.bf16.msra.mxu0 %v453
        %503 = vmatprep.subr.bf16.mxu0 0
        %504 = vmatpush1.bf16.msra.mxu0 %v454
        %505 = vmatprep.subr.bf16.mxu0 0
        %506 = vmatpush1.bf16.msra.mxu0 %v455
        %507 = vmatprep.subr.bf16.mxu0 0
        %508 = vmatpush1.bf16.msra.mxu0 %v456
        %509 = vmatprep.subr.bf16.mxu0 0
        %510 = vmatpush1.bf16.msra.mxu0 %v457
        %511 = vmatprep.subr.bf16.mxu0 0
        %512 = vmatpush1.bf16.msra.mxu0 %v458
        %513 = vmatprep.subr.bf16.mxu0 0
        %514 = vmatpush1.bf16.msra.mxu0 %v459
        %515 = vmatprep.subr.bf16.mxu0 0
        %516 = vmatpush1.bf16.msra.mxu0 %v460
        %517 = vmatprep.subr.bf16.mxu0 0
        %518 = vmatpush1.bf16.msra.mxu0 %v461
        %519 = vmatprep.subr.bf16.mxu0 0
        %520 = vmatpush1.bf16.msra.mxu0 %v462
        %521 = vmatprep.subr.bf16.mxu0 0
        %522 = vmatpush1.bf16.msra.mxu0 %v463
        %523 = vmatprep.subr.bf16.mxu0 0
        %524 = vmatpush1.bf16.msra.mxu0 %v464
        %525 = vmatprep.subr.bf16.mxu0 0
        %526 = vmatpush1.bf16.msra.mxu0 %v465
        %527 = vmatprep.subr.bf16.mxu0 0
        %528 = vmatpush1.bf16.msra.mxu0 %v466
        %529 = vmatprep.subr.bf16.mxu0 0
        %530 = vmatpush1.bf16.msra.mxu0 %v467
        %531 = vmatprep.subr.bf16.mxu0 0
        %532 = vmatpush1.bf16.msra.mxu0 %v468
        %533 = vmatprep.mubr.bf16.mxu0 %v300
        %534 = vmatmul.mubr.bf16.gmra.mrb[0].mxu0 %v299
        %v535 = vpop.f32.mrb[0].mxu0
        %v536 = vadd.f32 %v355, %v535
        %v537 = vpop.f32.mrb[0].mxu0
        %v538 = vpop.f32.mrb[0].mxu0
        %v539 = vadd.f32 %v355, %v538
        %v540 = vpop.f32.mrb[0].mxu0
        %541 = vdwg.mxu0
        %542 = vmatprep.subr.bf16.mxu0 0
        %543 = vmatpush1.bf16.msra.mxu0 %v469
        %544 = vmatprep.subr.bf16.mxu0 0
        %545 = vmatpush1.bf16.msra.mxu0 %v470
        %546 = vmatprep.subr.bf16.mxu0 0
        %547 = vmatpush1.bf16.msra.mxu0 %v471
        %548 = vmatprep.subr.bf16.mxu0 0
        %549 = vmatpush1.bf16.msra.mxu0 %v472
        %550 = vmatprep.subr.bf16.mxu0 0
        %551 = vmatpush1.bf16.msra.mxu0 %v473
        %552 = vmatprep.subr.bf16.mxu0 0
        %553 = vmatpush1.bf16.msra.mxu0 %v474
        %554 = vmatprep.subr.bf16.mxu0 0
        %555 = vmatpush1.bf16.msra.mxu0 %v475
        %556 = vmatprep.subr.bf16.mxu0 0
        %557 = vmatpush1.bf16.msra.mxu0 %v476
        %558 = vmatprep.subr.bf16.mxu0 0
        %559 = vmatpush1.bf16.msra.mxu0 0
        %560 = vmatprep.subr.bf16.mxu0 0
        %561 = vmatpush1.bf16.msra.mxu0 0
        %562 = vmatprep.subr.bf16.mxu0 0
        %563 = vmatpush1.bf16.msra.mxu0 0
        %564 = vmatprep.subr.bf16.mxu0 0
        %565 = vmatpush1.bf16.msra.mxu0 0
        %566 = vmatprep.subr.bf16.mxu0 0
        %567 = vmatpush1.bf16.msra.mxu0 0
        %568 = vmatprep.subr.bf16.mxu0 0
        %569 = vmatpush1.bf16.msra.mxu0 0
        %570 = vmatprep.subr.bf16.mxu0 0
        %571 = vmatpush1.bf16.msra.mxu0 0
        %572 = vmatprep.subr.bf16.mxu0 0
        %573 = vmatpush1.bf16.msra.mxu0 0
        %574 = vmatprep.mubr.bf16.mxu0 0
        %575 = vmatmul.mubr.bf16.gmra.mrb[0].mxu0 %v301
        %v576 = vpop.f32.mrb[0].mxu0
        %v577 = vadd.f32 %v536, %v576
        %v578 = vpop.f32.mrb[0].mxu0
        %v579 = vpop.f32.mrb[0].mxu0
        %v580 = vadd.f32 %v539, %v579
        %v581 = vpop.f32.mrb[0].mxu0
        %582 = vdwg.mxu0
        %v583 = vmax.f32 %v577, 0.0
        %v584 = vmax.f32 %v580, 0.0
        %v585 = vld [vmem:[%s269] sm:$0xff]
        %v586 = vld [vmem:[%s269 + $0x8] sm:$0xff]
        %588 = vset.pattern.permute.xlu0 0
        %589 = vperm.xlu0 %588, %v585
        %v590 = vpop.permute.xlu0 %589
        %593 = vset.pattern.permute.xlu0 0
        %594 = vperm.xlu0 %593, %v586
        %v595 = vpop.permute.xlu0 %594
        %v597 = vmul.f32 %v583, %v590
        %v598 = vmul.f32 %v584, %v595
        %v599 = vpack.c.bf16 %v598, %v597
        %vm600 = vcmask 1040384
        %vm601 = vsmask.f32 256
        %vm602 = vmand %vm600, %vm601
        %v603 = vld [vmem:[#allocation3] sm:$0x1]
        %v604 = vsel %vm602, 0, %v603
        %605 = vst [vmem:[#allocation3] sm:$0x1] %v604
        %vm606 = vsmask.f32 7938
        %vm607 = vmand %vm600, %vm606
        %v608 = vld [vmem:[#allocation3 + $0x8] sm:$0x1]
        %v609 = vsel %vm607, 0, %v608
        %610 = vst [vmem:[#allocation3 + $0x8] sm:$0x1] %v609
        %v612 = vunpack.c.l.b16 %v599
        %v613 = vunpack.c.h.b16 %v599
        %v614 = vpack.c.b16 %v612, %v612
        %v615 = vpack.c.b16 %v613, %v613
        %vm616 = vsmask.f32 4368
        %vm617 = vmor %vm601, %vm616
        %v619 = vshrl.u32 %v614, 16
        %v621 = vrot.slane %v619, 7
        %v622 = vshll.u32 %v614, 16
        %v624 = vor.u32 %v621, %v622
        %v625 = vrot.slane %v621, 4
        %v627 = vshrl.u32 %v615, 16
        %v629 = vrot.slane %v627, 7
        %v630 = vshll.u32 %v615, 16
        %v632 = vor.u32 %v629, %v630
        %v633 = vsel %vm617, %v625, %v632
        %v634 = vrot.slane %v629, 4
        %vm638 = vcmask 1043456
        %vm639 = vmand %vm638, %vm606
        %v640 = vld [vmem:[#allocation3] sm:$0xf]
        %v641 = vsel %vm639, %v624, %v640
        %642 = vst [vmem:[#allocation3] sm:$0xf] %v641
        %643 = vst [vmem:[#allocation3 + $0x4] sm:$0xf] %v633
        %v644 = vld [vmem:[#allocation3 + $0x8] sm:$0x1]
        %v645 = vsel %vm602, %v634, %v644
        %646 = vst [vmem:[#allocation3 + $0x8] sm:$0x1] %v645
        %v647 = vld [vmem:[#allocation3] sm:$0xf]
        %v648 = vld [vmem:[#allocation3 + $0x4] sm:$0xf]
        %v649 = vld [vmem:[#allocation3 + $0x8] sm:$0x1]
        %v650 = vld [vmem:[#allocation3] sm:$0xe]
        %v653 = vunpack.c.l.b16 %v647
        %v654 = vunpack.c.l.b16 %v648
        %v655 = vpack.c.b16 %v654, %v653
        %v658 = vunpack.c.l.b16 %v649
        %v659 = vpack.c.b16 %v658, %v658
        %vm660 = vsmask.f32 7424
        %v662 = vshrl.u32 %v655, 16
        %v664 = vshll.u32 %v655, 16
        %v666 = vrot.slane %v664, 1
        %v667 = vor.u32 %v662, %v666
        %v669 = vshll.u32 %v659, 16
        %v671 = vrot.slane %v669, 1
        %v672 = vsel %vm660, %v667, %v671
        %v675 = vunpack.c.l.b16 %v650
        %v676 = vpack.c.b16 %v654, %v675
        %vm677 = vcmask 1046528
        %v678 = vrot.slane %v676, 1
        %v679 = vrot.slane %v659, 1
        %v680 = vsel %vm677, %v678, %v679
        %v682 = vld [vmem:[%s4] sm:$0xf]
        %v683 = vld [vmem:[%s4 + $0x4] sm:$0xf]
        %v684 = vld [vmem:[%s4 + $0x8] sm:$0xf]
        %v685 = vld [vmem:[%s4 + $0xc] sm:$0xf]
        %v686 = vld [vmem:[%s4 + $0x10] sm:$0xf]
        %v687 = vld [vmem:[%s4 + $0x14] sm:$0xf]
        %v688 = vld [vmem:[%s4 + $0x18] sm:$0xf]
        %v689 = vld [vmem:[%s4 + $0x1c] sm:$0xf]
        %v690 = vld [vmem:[%s4 + $0x20] sm:$0xf]
        %v691 = vld [vmem:[%s4 + $0x24] sm:$0xf]
        %v692 = vld [vmem:[%s4 + $0x28] sm:$0xf]
        %v693 = vld [vmem:[%s4 + $0x2c] sm:$0xf]
        %v694 = vld [vmem:[%s4 + $0x30] sm:$0xf]
        %v695 = vld [vmem:[%s4 + $0x34] sm:$0xf]
        %v696 = vld [vmem:[%s4 + $0x38] sm:$0xf]
        %v697 = vld [vmem:[%s4 + $0x3c] sm:$0xf]
        %v698 = vld [vmem:[%s4 + $0x40] sm:$0xf]
        %v699 = vld [vmem:[%s4 + $0x44] sm:$0xf]
        %v700 = vld [vmem:[%s4 + $0x48] sm:$0xf]
        %v701 = vld [vmem:[%s4 + $0x4c] sm:$0xf]
        %v702 = vld [vmem:[%s4 + $0x50] sm:$0xf]
        %v703 = vld [vmem:[%s4 + $0x54] sm:$0xf]
        %v704 = vld [vmem:[%s4 + $0x58] sm:$0xf]
        %v705 = vld [vmem:[%s4 + $0x5c] sm:$0xf]
        %v706 = vld [vmem:[%s4 + $0x60] sm:$0xf]
        %v707 = vld [vmem:[%s4 + $0x64] sm:$0xf]
        %v708 = vld [vmem:[%s4 + $0x68] sm:$0xf]
        %v709 = vld [vmem:[%s4 + $0x6c] sm:$0xf]
        %v710 = vld [vmem:[%s4 + $0x70] sm:$0xf]
        %v711 = vld [vmem:[%s4 + $0x74] sm:$0xf]
        %v712 = vld [vmem:[%s4 + $0x78] sm:$0xf]
        %v713 = vld [vmem:[%s4 + $0x7c] sm:$0xf]
        %v714 = vld [vmem:[%s4 + $0x80] sm:$0xf]
        %v715 = vld [vmem:[%s4 + $0x84] sm:$0xf]
        %v716 = vld [vmem:[%s4 + $0x88] sm:$0xf]
        %v717 = vld [vmem:[%s4 + $0x8c] sm:$0xf]
        %v718 = vld [vmem:[%s4 + $0x90] sm:$0xf]
        %v719 = vld [vmem:[%s4 + $0x94] sm:$0xf]
        %v720 = vld [vmem:[%s4 + $0x98] sm:$0xf]
        %v721 = vld [vmem:[%s4 + $0x9c] sm:$0xf]
        %v722 = vld [vmem:[%s4 + $0xa0] sm:$0xf]
        %v723 = vld [vmem:[%s4 + $0xa4] sm:$0xf]
        %v724 = vld [vmem:[%s4 + $0xa8] sm:$0xf]
        %v725 = vld [vmem:[%s4 + $0xac] sm:$0xf]
        %v726 = vld [vmem:[%s4 + $0xb0] sm:$0xf]
        %v727 = vld [vmem:[%s4 + $0xb4] sm:$0xf]
        %v728 = vld [vmem:[%s4 + $0xb8] sm:$0xf]
        %v729 = vld [vmem:[%s4 + $0xbc] sm:$0xf]
        %v730 = vld [vmem:[%s5] sm:$0x1]
        %v732 = vlaneseq
        %v733 = vshrl.u32 %v732, 7
        %v734 = vsub.s32 0, %v733
        %v735 = vrot.slane %v730, %v734
        %v785 = vunpack.c.l.b16 %v682
        %v786 = vunpack.c.l.b16 %v683
        %v787 = vunpack.c.l.b16 %v684
        %v788 = vunpack.c.l.b16 %v685
        %v789 = vunpack.c.l.b16 %v686
        %v790 = vunpack.c.l.b16 %v687
        %v791 = vunpack.c.l.b16 %v688
        %v792 = vunpack.c.l.b16 %v689
        %v793 = vunpack.c.l.b16 %v690
        %v794 = vunpack.c.l.b16 %v691
        %v795 = vunpack.c.l.b16 %v692
        %v796 = vunpack.c.l.b16 %v693
        %v797 = vunpack.c.l.b16 %v694
        %v798 = vunpack.c.l.b16 %v695
        %v799 = vunpack.c.l.b16 %v696
        %v800 = vunpack.c.l.b16 %v697
        %v801 = vunpack.c.l.b16 %v698
        %v802 = vunpack.c.l.b16 %v699
        %v803 = vunpack.c.l.b16 %v700
        %v804 = vunpack.c.l.b16 %v701
        %v805 = vunpack.c.l.b16 %v702
        %v806 = vunpack.c.l.b16 %v703
        %v807 = vunpack.c.l.b16 %v704
        %v808 = vunpack.c.l.b16 %v705
        %v809 = vunpack.c.l.b16 %v706
        %v810 = vunpack.c.l.b16 %v707
        %v811 = vunpack.c.l.b16 %v708
        %v812 = vunpack.c.l.b16 %v709
        %v813 = vunpack.c.l.b16 %v710
        %v814 = vunpack.c.l.b16 %v711
        %v815 = vunpack.c.l.b16 %v712
        %v816 = vunpack.c.l.b16 %v713
        %v817 = vunpack.c.l.b16 %v714
        %v818 = vunpack.c.l.b16 %v715
        %v819 = vunpack.c.l.b16 %v716
        %v820 = vunpack.c.l.b16 %v717
        %v821 = vunpack.c.l.b16 %v718
        %v822 = vunpack.c.l.b16 %v719
        %v823 = vunpack.c.l.b16 %v720
        %v824 = vunpack.c.l.b16 %v721
        %v825 = vunpack.c.l.b16 %v722
        %v826 = vunpack.c.l.b16 %v723
        %v827 = vunpack.c.l.b16 %v724
        %v828 = vunpack.c.l.b16 %v725
        %v829 = vunpack.c.l.b16 %v726
        %v830 = vunpack.c.l.b16 %v727
        %v831 = vunpack.c.l.b16 %v728
        %v832 = vunpack.c.l.b16 %v729
        %v833 = vpack.c.b16 %v786, %v785
        %v834 = vpack.c.b16 %v788, %v787
        %v835 = vpack.c.b16 %v790, %v789
        %v836 = vpack.c.b16 %v792, %v791
        %v837 = vpack.c.b16 %v794, %v793
        %v838 = vpack.c.b16 %v796, %v795
        %v839 = vpack.c.b16 %v798, %v797
        %v840 = vpack.c.b16 %v800, %v799
        %v841 = vpack.c.b16 %v802, %v801
        %v842 = vpack.c.b16 %v804, %v803
        %v843 = vpack.c.b16 %v806, %v805
        %v844 = vpack.c.b16 %v808, %v807
        %v845 = vpack.c.b16 %v810, %v809
        %v846 = vpack.c.b16 %v812, %v811
        %v847 = vpack.c.b16 %v814, %v813
        %v848 = vpack.c.b16 %v816, %v815
        %v849 = vpack.c.b16 %v818, %v817
        %v850 = vpack.c.b16 %v820, %v819
        %v851 = vpack.c.b16 %v822, %v821
        %v852 = vpack.c.b16 %v824, %v823
        %v853 = vpack.c.b16 %v826, %v825
        %v854 = vpack.c.b16 %v828, %v827
        %v855 = vpack.c.b16 %v830, %v829
        %v856 = vpack.c.b16 %v832, %v831
        %881 = vmatprep.subr.bf16.mxu0 0
        %882 = vmatpush1.bf16.msra.mxu0 %v833
        %883 = vmatprep.subr.bf16.mxu0 0
        %884 = vmatpush1.bf16.msra.mxu0 %v834
        %885 = vmatprep.subr.bf16.mxu0 0
        %886 = vmatpush1.bf16.msra.mxu0 %v835
        %887 = vmatprep.subr.bf16.mxu0 0
        %888 = vmatpush1.bf16.msra.mxu0 %v836
        %889 = vmatprep.subr.bf16.mxu0 0
        %890 = vmatpush1.bf16.msra.mxu0 %v837
        %891 = vmatprep.subr.bf16.mxu0 0
        %892 = vmatpush1.bf16.msra.mxu0 %v838
        %893 = vmatprep.subr.bf16.mxu0 0
        %894 = vmatpush1.bf16.msra.mxu0 %v839
        %895 = vmatprep.subr.bf16.mxu0 0
        %896 = vmatpush1.bf16.msra.mxu0 %v840
        %897 = vmatprep.subr.bf16.mxu0 0
        %898 = vmatpush1.bf16.msra.mxu0 %v841
        %899 = vmatprep.subr.bf16.mxu0 0
        %900 = vmatpush1.bf16.msra.mxu0 %v842
        %901 = vmatprep.subr.bf16.mxu0 0
        %902 = vmatpush1.bf16.msra.mxu0 %v843
        %903 = vmatprep.subr.bf16.mxu0 0
        %904 = vmatpush1.bf16.msra.mxu0 %v844
        %905 = vmatprep.subr.bf16.mxu0 0
        %906 = vmatpush1.bf16.msra.mxu0 %v845
        %907 = vmatprep.subr.bf16.mxu0 0
        %908 = vmatpush1.bf16.msra.mxu0 %v846
        %909 = vmatprep.subr.bf16.mxu0 0
        %910 = vmatpush1.bf16.msra.mxu0 %v847
        %911 = vmatprep.subr.bf16.mxu0 0
        %912 = vmatpush1.bf16.msra.mxu0 %v848
        %913 = vmatprep.mubr.bf16.mxu0 %v672
        %914 = vmatmul.mubr.bf16.gmra.mrb[0].mxu0 %v655
        %v915 = vpop.f32.mrb[0].mxu0
        %v916 = vadd.f32 %v735, %v915
        %v917 = vpop.f32.mrb[0].mxu0
        %v918 = vpop.f32.mrb[0].mxu0
        %v919 = vadd.f32 %v735, %v918
        %v920 = vpop.f32.mrb[0].mxu0
        %921 = vdwg.mxu0
        %922 = vmatprep.subr.bf16.mxu0 0
        %923 = vmatpush1.bf16.msra.mxu0 %v849
        %924 = vmatprep.subr.bf16.mxu0 0
        %925 = vmatpush1.bf16.msra.mxu0 %v850
        %926 = vmatprep.subr.bf16.mxu0 0
        %927 = vmatpush1.bf16.msra.mxu0 %v851
        %928 = vmatprep.subr.bf16.mxu0 0
        %929 = vmatpush1.bf16.msra.mxu0 %v852
        %930 = vmatprep.subr.bf16.mxu0 0
        %931 = vmatpush1.bf16.msra.mxu0 %v853
        %932 = vmatprep.subr.bf16.mxu0 0
        %933 = vmatpush1.bf16.msra.mxu0 %v854
        %934 = vmatprep.subr.bf16.mxu0 0
        %935 = vmatpush1.bf16.msra.mxu0 %v855
        %936 = vmatprep.subr.bf16.mxu0 0
        %937 = vmatpush1.bf16.msra.mxu0 %v856
        %938 = vmatprep.subr.bf16.mxu0 0
        %939 = vmatpush1.bf16.msra.mxu0 0
        %940 = vmatprep.subr.bf16.mxu0 0
        %941 = vmatpush1.bf16.msra.mxu0 0
        %942 = vmatprep.subr.bf16.mxu0 0
        %943 = vmatpush1.bf16.msra.mxu0 0
        %944 = vmatprep.subr.bf16.mxu0 0
        %945 = vmatpush1.bf16.msra.mxu0 0
        %946 = vmatprep.subr.bf16.mxu0 0
        %947 = vmatpush1.bf16.msra.mxu0 0
        %948 = vmatprep.subr.bf16.mxu0 0
        %949 = vmatpush1.bf16.msra.mxu0 0
        %950 = vmatprep.subr.bf16.mxu0 0
        %951 = vmatpush1.bf16.msra.mxu0 0
        %952 = vmatprep.subr.bf16.mxu0 0
        %953 = vmatpush1.bf16.msra.mxu0 0
        %954 = vmatprep.mubr.bf16.mxu0 0
        %955 = vmatmul.mubr.bf16.gmra.mrb[0].mxu0 %v680
        %v956 = vpop.f32.mrb[0].mxu0
        %v957 = vadd.f32 %v916, %v956
        %v958 = vpop.f32.mrb[0].mxu0
        %v959 = vpop.f32.mrb[0].mxu0
        %v960 = vadd.f32 %v919, %v959
        %v961 = vpop.f32.mrb[0].mxu0
        %962 = vdwg.mxu0
        %v963 = vmax.f32 %v957, 0.0
        %v964 = vmax.f32 %v960, 0.0
        %965 = vst [vmem:[%s259] sm:$0xff] %v963
        %966 = vst [vmem:[%s259 + $0x8] sm:$0xff] %v964
        %s967 = sand.u32 %s164, 1
        %s968 = scalar_lea.sflag [#allocation5], %s967
        %s969 = sand.u32 %s164, 1
        %s970 = smul.addr %s969, 16
        %s971 = scalar_lea.vmem [#allocation4], %s970
        // Predicated region
        $region45: #{re2_encoder.1} parent=43 // pred_check
          %p972 = pneg %p174
        $region46: #{re2_encoder.1} parent=43 // pred_check_branch
          %974 = sbr.rel (%p972) target = $region48
        $region47: #{re2_encoder.1} parent=43 // pred_region
          %s976 = ssub.s32 256, 256
          %977 = vsyncadd %s968, %s976
          %s978 = smul.addr %s20, 2
          %s979 = smul.addr %s978, 128
          %s980 = scalar_lea.hbm %s6, %s979
          %s981 = sshll.u32 %s971, 4
          %s982 = int_to_ptr.vmem [resolvable:$true] %s981
          %987 = dma.vmem_to_hbm [thread:$0]  %s982, 256, %s980, %s968, 128, 128, 8
        $region48: #{re2_encoder.1} parent=43 // pred_fallthru
          _
      $region44: #{re2_encoder.1} parent=5 // pred_fallthru
        _
      %p988 = scmp.le.s32.totalorder 2, %s15
      // Predicated region
      $region49: #{re2_encoder.1} parent=5 // pred_check
        %p989 = pneg %p988
      $region50: #{re2_encoder.1} parent=5 // pred_check_branch
        %991 = sbr.rel (%p989) target = $region52
      $region51: #{re2_encoder.1} parent=5 // pred_region
        %s992 = ssub.s32 %s15, 2
        // Predicated region
        $region53: #{re2_encoder.1} parent=51 // pred_check
          %p993 = pneg %p180
        $region54: #{re2_encoder.1} parent=51 // pred_check_branch
          %995 = sbr.rel (%p993) target = $region56
        $region55: #{re2_encoder.1} parent=51 // pred_region
          %s996 = sand.u32 %s165, 1
          %s997 = scalar_lea.sflag [#allocation5], %s996
          %s998 = sand.u32 %s165, 1
          %s999 = smul.addr %s998, 16
          %s1000 = scalar_lea.vmem [#allocation4], %s999
          %1001 = dma.done %s997, 256
        $region56: #{re2_encoder.1} parent=51 // pred_fallthru
          _
      $region52: #{re2_encoder.1} parent=5 // pred_fallthru
        _
    $region6: #{re2_encoder.1} parent=1 // loop_footer
      %s19 = sadd.s32 1, %s15
    $region7: #{re2_encoder.1} parent=1 // loop_footer_branch
      %14 = sbr.rel target = $region3
    $region8: #{re2_encoder.1} parent=1 // loop_exit
      _
    %1002 = vsyncpa [#allocation5], 1
    %s1003 = scalar_lea.sflag [#allocation5], 1
    %1004 = vsyncpa %s1003, 1

</llo_original>
